<compile_context>
chip_gen: v5e
topology: v5e:2x2
jax: 0.10.0
libtpu: 0.0.40
codegen_flags: <defaults>
</compile_context>

<pallas_src>
import numpy as np
import jax
import jax.numpy as jnp
from jax.experimental import pallas as pl
from jax.experimental.pallas import tpu as pltpu

_LANE = 128
_SUBLANE = 8


# --------------------------------------------------------------------------
# Hardware / footprint helpers
# --------------------------------------------------------------------------
def _padded_block_bytes(rows, cols, itemsize):
    """Real VMEM footprint of a (rows, cols) block after (sublane, lane) padding."""
    lanes = -(-cols // _LANE) * _LANE
    pack = max(1, 4 // itemsize)               # rows packed per 32-bit sublane
    sub = -(-rows // (_SUBLANE * pack)) * (_SUBLANE * pack)
    return sub * lanes * itemsize


def _vmem_capacity_bytes():
    """Best-effort per-core VMEM capacity; conservative fallback (v7x = 64 MiB/TC)."""
    try:
        info = pltpu.get_tpu_info()
        for name in ("vmem_capacity_bytes", "vmem_size_bytes", "vmem_bytes"):
            v = getattr(info, name, None)
            if v:
                return int(v)
    except Exception:
        pass
    return 64 * 1024 * 1024


def _tensorcores_per_chip():
    """v5e/v6e: 1 TensorCore per chip; v7x: 2."""
    try:
        kind = jax.devices()[0].device_kind.lower()
    except Exception:
        return 1
    return 2 if ("v7" in kind or "7x" in kind) else 1


def _plan(S, row_bytes, step_budget, row_align):
    """Pick (ts, rows_inner, sub, n_blocks): chunk rows, inner-loop rows, acc rows."""
    if S < row_align:
        return S, S, S, 1                      # single tiny block == full extent
    ts_max = (S // row_align) * row_align      # keep every block start inside S
    ts = step_budget // max(row_bytes, 1)
    ts = (ts // row_align) * row_align
    ts = max(row_align, min(ts, ts_max))
    if ts > 512:
        ts = (ts // 512) * 512                 # inner loop uses 512-row sub-blocks
        rows_inner = 512
    else:
        rows_inner = ts
    n_blocks = -(-S // ts)
    return ts, rows_inner, 8, n_blocks


# --------------------------------------------------------------------------
# Kernel
# --------------------------------------------------------------------------
def _make_kernel(*, has_weight, n_seq, ts, rows_inner, sub, opc, s_total, needs_mask):
    n_inner = ts // rows_inner

    def kernel(*refs):
        if has_weight:
            rep_ref, sel_ref, pred_ref, tgt_ref, wgt_ref, out_ref, acc_ref = refs
        else:
            rep_ref, sel_ref, pred_ref, tgt_ref, out_ref, acc_ref = refs

        i = pl.program_id(0)                   # parallel axis (TensorCores)
        j = pl.program_id(1)                   # sequential S-chunk axis

        @pl.when(j == 0)
        def _init():
            acc_ref[...] = jnp.zeros_like(acc_ref)

        rep = rep_ref[...]                     # (PC, O*PC) 0/1 replicator
        block_row0 = (i * n_seq + j) * ts      # global row of this block's first row

        def body(r, acc):
            r0 = pl.multiple_of(r * rows_inner, rows_inner)
            # Load native dtype, upcast in-register (halves DMA bytes for bf16 in).
            p = pred_ref[pl.ds(r0, rows_inner), :].astype(jnp.float32)   # (ri, PC)
            t = tgt_ref[pl.ds(r0, rows_inner), :].astype(jnp.float32)    # (ri, O*PC)
            # Replicate pred across orders on the otherwise-idle MXU; the 0/1
            # selector with HIGHEST precision keeps the f32 copy exact.
            p_rep = jnp.dot(p, rep, preferred_element_type=jnp.float32,
                            precision=jax.lax.Precision.HIGHEST)         # (ri, O*PC)
            d = p_rep - t
            ad = jnp.abs(d)
            e = jnp.where(ad < 1.0, 0.5 * d * d, ad - 0.5)               # beta = 1.0
            if has_weight:
                e = e * wgt_ref[pl.ds(r0, rows_inner), :].astype(jnp.float32)
            if needs_mask:
                # Ragged S tail: rows beyond S contain OOB garbage -> force to 0.
                ridx = (jax.lax.broadcasted_iota(jnp.int32, (rows_inner, 1), 0)
                        + block_row0 + r * rows_inner)
                e = jnp.where(ridx < s_total, e, 0.0)
            # (rows_inner, O*PC) -> (sub, O*PC): leading-dim split + pure vreg adds.
            return acc + jnp.sum(e.reshape(rows_inner // sub, sub, opc), axis=0)

        part = jax.lax.fori_loop(0, n_inner, body,
                                 jnp.zeros((sub, opc), jnp.float32))
        acc_ref[...] += part

        @pl.when(j == pl.num_programs(1) - 1)
        def _finalize():
            # Single cross-sublane reduce + per-order fold (MXU) + one (1, O) store.
            tot = jnp.sum(acc_ref[...], axis=0, keepdims=True)            # (1, O*PC)
            out_ref[...] = jnp.dot(tot, sel_ref[...],
                                   preferred_element_type=jnp.float32,
                                   precision=jax.lax.Precision.HIGHEST)   # (1, O)

    return kernel


# --------------------------------------------------------------------------
# Wrapper
# --------------------------------------------------------------------------
def ordered_pts_smooth_l1_loss(pred, target, weight=None, avg_factor=None,
                               loss_weight=1.0, max_step_bytes=None):
    """pred: [S,P,C]; target: [S,O,P,C]; weight: [S,O,P,C] or None."""
    if avg_factor is None:
        raise ValueError("avg_factor should not be none for OrderedPtsL1Loss")
    S, O, P, C = target.shape
    assert pred.shape == (S, P, C)
    PC = P * C
    OPC = O * PC

    # Contiguous reshapes only (no transposes, no casts, no padding in HBM).
    pred2 = pred.reshape(S, PC)
    tgt2 = target.reshape(S, OPC)
    has_weight = weight is not None
    wgt2 = weight.reshape(S, OPC) if has_weight else None

    # Tiny 0/1 constants: `rep` replicates pred across orders, `sel` folds
    # per-(order, pt, coord) lane sums into per-order sums at finalize.
    rep_np = np.zeros((PC, OPC), np.float32)
    sel_np = np.zeros((OPC, O), np.float32)
    for o in range(O):
        rep_np[np.arange(PC), o * PC + np.arange(PC)] = 1.0
        sel_np[o * PC:(o + 1) * PC, o] = 1.0
    rep_mat = jnp.asarray(rep_np)
    sel_mat = jnp.asarray(sel_np)

    # Dtype-aware sublane alignment (8 rows f32, 16 bf16, 32 int8/fp8).
    itemsizes = [pred2.dtype.itemsize, tgt2.dtype.itemsize]
    if has_weight:
        itemsizes.append(wgt2.dtype.itemsize)
    row_align = _SUBLANE * max(max(1, 4 // isz) for isz in itemsizes)

    # Per-row streamed bytes including lane padding (real DMA / VMEM footprint).
    row_bytes = (_padded_block_bytes(row_align, PC, pred2.dtype.itemsize)
                 + _padded_block_bytes(row_align, OPC, tgt2.dtype.itemsize)
                 + (_padded_block_bytes(row_align, OPC, wgt2.dtype.itemsize)
                    if has_weight else 0)) // row_align

    vmem_cap = _vmem_capacity_bytes()
    if max_step_bytes is None:
        # Generation-aware: double-buffered input streams capped at ~48 MiB total
        # (fits v7x's 64 MiB/TC with headroom; comfortable on v5e/v6e's 128 MiB).
        step_budget = max(8 * 2**20, min(48 * 2**20, vmem_cap - 16 * 2**20)) // 2
    else:
        step_budget = int(max_step_bytes)

    ts, rows_inner, sub, n_blocks = _plan(S, row_bytes, step_budget, row_align)

    # Use the parallel axis only where there are 2 TensorCores and it splits evenly.
    cores = _tensorcores_per_chip()
    if cores >= 2 and n_blocks >= 2 and n_blocks % 2 == 0:
        n_par, n_seq = 2, n_blocks // 2
    else:
        n_par, n_seq = 1, n_blocks
    needs_mask = (n_blocks * ts != S)

    kernel = _make_kernel(has_weight=has_weight, n_seq=n_seq, ts=ts,
                          rows_inner=rows_inner, sub=sub, opc=OPC,
                          s_total=S, needs_mask=needs_mask)

    in_specs = [
        pl.BlockSpec((PC, OPC), lambda i, j: (0, 0)),            # rep (resident)
        pl.BlockSpec((OPC, O), lambda i, j: (0, 0)),             # sel (resident)
        pl.BlockSpec((ts, PC), lambda i, j: (i * n_seq + j, 0)),
        pl.BlockSpec((ts, OPC), lambda i, j: (i * n_seq + j, 0)),
    ]
    operands = [rep_mat, sel_mat, pred2, tgt2]
    if has_weight:
        in_specs.append(pl.BlockSpec((ts, OPC), lambda i, j: (i * n_seq + j, 0)))
        operands.append(wgt2)

    # Explicit VMEM budget: double-buffered streams + resident constants +
    # scratch + in-flight intermediates + headroom, capped at physical VMEM.
    step_bytes = (_padded_block_bytes(ts, PC, pred2.dtype.itemsize)
                  + _padded_block_bytes(ts, OPC, tgt2.dtype.itemsize)
                  + (_padded_block_bytes(ts, OPC, wgt2.dtype.itemsize)
                     if has_weight else 0))
    const_bytes = _padded_block_bytes(PC, OPC, 4) + _padded_block_bytes(OPC, O, 4)
    scratch_bytes = _padded_block_bytes(sub, OPC, 4)
    live_bytes = 6 * _padded_block_bytes(rows_inner, OPC, 4)
    vmem_needed = (2 * step_bytes + 2 * const_bytes + scratch_bytes
                   + 2 * _padded_block_bytes(1, O, 4) + live_bytes + 4 * 2**20)
    vmem_limit = int(min(vmem_cap, max(vmem_needed, 32 * 2**20)))

    partials = pl.pallas_call(
        kernel,
        out_shape=jax.ShapeDtypeStruct((n_par, O), jnp.float32),
        grid_spec=pltpu.PrefetchScalarGridSpec(
            num_scalar_prefetch=0,
            grid=(n_par, n_seq),
            in_specs=in_specs,
            out_specs=pl.BlockSpec((1, O), lambda i, j: (i, 0)),
            scratch_shapes=[pltpu.VMEM((sub, OPC), jnp.float32)],
        ),
        compiler_params=pltpu.CompilerParams(
            dimension_semantics=("parallel", "arbitrary"),
            vmem_limit_bytes=vmem_limit),
    )(*operands)

    per_order = jnp.sum(partials, axis=0)                         # (O,)
    return loss_weight * per_order / jnp.asarray(avg_factor, jnp.float32)


class OrderedPtsSmoothL1Loss:
    """JAX/Pallas port of the PyTorch module's forward pass."""

    def __init__(self, reduction='mean', loss_weight=1.0):
        assert reduction == 'mean'
        self.reduction = reduction
        self.loss_weight = loss_weight

    def __call__(self, pred, target, weight=None, avg_factor=None,
                 reduction_override=None):
        assert reduction_override in (None, 'mean')
        return ordered_pts_smooth_l1_loss(
            pred, target, weight, avg_factor=avg_factor,
            loss_weight=self.loss_weight)


def _reference(pred, target, weight, avg_factor, loss_weight):
    """Pure-JAX reference mirroring the PyTorch code."""
    p = jnp.broadcast_to(pred[:, None, :, :].astype(jnp.float32), target.shape)
    diff = p - target.astype(jnp.float32)
    ad = jnp.abs(diff)
    loss = jnp.where(ad < 1.0, 0.5 * diff * diff, ad - 0.5)
    if weight is not None:
        loss = loss * weight.astype(jnp.float32)
    loss = jnp.transpose(loss, (1, 0, 2, 3)).sum((1, 2, 3)) / avg_factor
    return loss_weight * loss


if __name__ == "__main__":
    key = jax.random.PRNGKey(0)
    k1, k2, k3 = jax.random.split(key, 3)

    S, O, P, C = 4, 8, 16, 2          # num_samples, num_order, num_pts, num_coords
    pred = jax.random.normal(k1, (S, P, C), dtype=jnp.float32)
    target = jax.random.normal(k2, (S, O, P, C), dtype=jnp.float32)
    weight = (jax.random.uniform(k3, (S, O, P, C)) > 0.3).astype(jnp.float32)
    avg_factor = 7.5

    loss_mod = OrderedPtsSmoothL1Loss(reduction='mean', loss_weight=1.0)

    # Weighted path.
    out_w = jax.block_until_ready(
        loss_mod(pred, target, weight=weight, avg_factor=avg_factor))
    np.testing.assert_allclose(
        np.asarray(out_w),
        np.asarray(_reference(pred, target, weight, avg_factor, 1.0)),
        rtol=1e-5, atol=1e-5)
    assert out_w.shape == (O,)

    # weight=None path (separate kernel variant, no ones tensor materialized).
    out_nw = jax.block_until_ready(
        loss_mod(pred, target, weight=None, avg_factor=avg_factor))
    np.testing.assert_allclose(
        np.asarray(out_nw),
        np.asarray(_reference(pred, target, None, avg_factor, 1.0)),
        rtol=1e-5, atol=1e-5)

    # Multi-chunk + ragged-tail (in-kernel mask) path: shrink the per-step budget.
    S2 = 20
    k4, k5, k6 = jax.random.split(jax.random.PRNGKey(1), 3)
    pred_b = jax.random.normal(k4, (S2, P, C), dtype=jnp.float32)
    target_b = jax.random.normal(k5, (S2, O, P, C), dtype=jnp.float32)
    weight_b = (jax.random.uniform(k6, (S2, O, P, C)) > 0.3).astype(jnp.float32)
    out_b = jax.block_until_ready(
        ordered_pts_smooth_l1_loss(pred_b, target_b, weight_b,
                                   avg_factor=avg_factor, loss_weight=1.0,
                                   max_step_bytes=20000))
    np.testing.assert_allclose(
        np.asarray(out_b),
        np.asarray(_reference(pred_b, target_b, weight_b, avg_factor, 1.0)),
        rtol=1e-5, atol=1e-5)

    print("KERNEL_OK")
</pallas_src>

<mosaic_0001>
module attributes {stable_mosaic.version = 11 : i64} {
  func.func @kernel(%arg0: i32, %arg1: i32, %arg2: memref<32x256xf32, #tpu.memory_space<vmem>>, %arg3: memref<256x8xf32, #tpu.memory_space<vmem>>, %arg4: memref<4x32xf32, #tpu.memory_space<vmem>>, %arg5: memref<4x256xf32, #tpu.memory_space<vmem>>, %arg6: memref<4x256xf32, #tpu.memory_space<vmem>>, %arg7: memref<1x8xf32, #tpu.memory_space<vmem>>, %arg8: memref<4x256xf32, #tpu.memory_space<vmem>>) attributes {dimension_semantics = [#tpu.dimension_semantics<parallel>, #tpu.dimension_semantics<arbitrary>], iteration_bounds = array<i64: 1, 1>, scalar_prefetch = 0 : i64, scratch_operands = 1 : i64, tpu.core_type = #tpu.core_type<tc>, window_params = [{pipeline_mode = #tpu.pipeline_mode<synchronous>, transform_indices = @transform_0, window_bounds = array<i64: 32, 256>}, {pipeline_mode = #tpu.pipeline_mode<synchronous>, transform_indices = @transform_1, window_bounds = array<i64: 256, 8>}, {transform_indices = @transform_2, window_bounds = array<i64: 4, 32>}, {transform_indices = @transform_3, window_bounds = array<i64: 4, 256>}, {transform_indices = @transform_4, window_bounds = array<i64: 4, 256>}, {transform_indices = @transform_5, window_bounds = array<i64: 1, 8>}]} {
    %c0_i32 = arith.constant 0 : i32
    %0 = arith.cmpi eq, %arg1, %c0_i32 : i32
    %1 = arith.extui %0 : i1 to i32
    %c0_i32_0 = arith.constant 0 : i32
    %2 = arith.cmpi ne, %1, %c0_i32_0 : i32
    scf.if %2 {
      %cst_17 = arith.constant 0.000000e+00 : f32
      %34 = vector.broadcast %cst_17 : f32 to vector<4x256xf32>
      %c0_18 = arith.constant 0 : index
      %c0_19 = arith.constant 0 : index
      %35 = vector.load %arg8[%c0_18, %c0_19] : memref<4x256xf32, #tpu.memory_space<vmem>>, vector<4x256xf32>
      tpu.vector_store %arg8[%c0_18, %c0_19], %34 {strides = array<i32>} : memref<4x256xf32, #tpu.memory_space<vmem>>, vector<4x256xf32>,
    } else {
    }
    %c0 = arith.constant 0 : index
    %c0_1 = arith.constant 0 : index
    %3 = vector.load %arg2[%c0, %c0_1] : memref<32x256xf32, #tpu.memory_space<vmem>>, vector<32x256xf32>
    %cst = arith.constant 0.000000e+00 : f32
    %4 = vector.broadcast %cst : f32 to vector<4x256xf32>
    %c0_i32_2 = arith.constant 0 : i32
    %c4_i32 = arith.constant 4 : i32
    %5 = arith.muli %c0_i32_2, %c4_i32 : i32
    %6 = tpu.assume_multiple %5, 4 : i32
    %7 = arith.index_cast %6 : i32 to index
    %c0_3 = arith.constant 0 : index
    %8 = vector.load %arg4[%7, %c0_3] : memref<4x32xf32, #tpu.memory_space<vmem>>, vector<4x32xf32>
    %9 = arith.index_cast %6 : i32 to index
    %c0_4 = arith.constant 0 : index
    %10 = vector.load %arg5[%9, %c0_4] : memref<4x256xf32, #tpu.memory_space<vmem>>, vector<4x256xf32>
    %cst_5 = arith.constant dense<0.000000e+00> : vector<4x256xf32>
    %11 = tpu.matmul %8, %3, %cst_5 {dimension_numbers = #tpu.dot_dimension_numbers<[1], [0], [0], [1], [0, 0, 1, 1], [], []>, precision = #tpu.contract_precision<fp32>} : vector<4x32xf32>, vector<32x256xf32>, vector<4x256xf32> -> vector<4x256xf32>
    %12 = arith.subf %11, %10 : vector<4x256xf32>
    %13 = math.absf %12 : vector<4x256xf32>
    %cst_6 = arith.constant 1.000000e+00 : f32
    %14 = vector.broadcast %cst_6 : f32 to vector<4x256xf32>
    %15 = arith.cmpf olt, %13, %14 : vector<4x256xf32>
    %cst_7 = arith.constant 5.000000e-01 : f32
    %16 = vector.broadcast %cst_7 : f32 to vector<4x256xf32>
    %17 = arith.mulf %16, %12 : vector<4x256xf32>
    %18 = arith.mulf %17, %12 : vector<4x256xf32>
    %cst_8 = arith.constant 5.000000e-01 : f32
    %19 = vector.broadcast %cst_8 : f32 to vector<4x256xf32>
    %20 = arith.subf %13, %19 : vector<4x256xf32>
    %21 = arith.select %15, %18, %20 : vector<4x256xi1>, vector<4x256xf32>
    %22 = arith.index_cast %6 : i32 to index
    %c0_9 = arith.constant 0 : index
    %23 = vector.load %arg6[%22, %c0_9] : memref<4x256xf32, #tpu.memory_space<vmem>>, vector<4x256xf32>
    %24 = arith.mulf %21, %23 : vector<4x256xf32>
    %25 = vector.shape_cast %24 : vector<4x256xf32> to vector<1x4x256xf32>
    %cst_10 = arith.constant dense<0.000000e+00> : vector<4x256xf32>
    %26 = vector.multi_reduction <add>, %25, %cst_10 [0] : vector<1x4x256xf32> to vector<4x256xf32>
    %27 = arith.addf %4, %26 : vector<4x256xf32>
    %c1_i32 = arith.constant 1 : i32
    %c0_11 = arith.constant 0 : index
    %c0_12 = arith.constant 0 : index
    %28 = vector.load %arg8[%c0_11, %c0_12] : memref<4x256xf32, #tpu.memory_space<vmem>>, vector<4x256xf32>
    %29 = arith.addf %28, %27 : vector<4x256xf32>
    %c0_13 = arith.constant 0 : index
    %c0_14 = arith.constant 0 : index
    %30 = vector.load %arg8[%c0_13, %c0_14] : memref<4x256xf32, #tpu.memory_space<vmem>>, vector<4x256xf32>
    tpu.vector_store %arg8[%c0_13, %c0_14], %29 {strides = array<i32>} : memref<4x256xf32, #tpu.memory_space<vmem>>, vector<4x256xf32>,
    %c0_i32_15 = arith.constant 0 : i32
    %31 = arith.cmpi eq, %arg1, %c0_i32_15 : i32
    %32 = arith.extui %31 : i1 to i32
    %c0_i32_16 = arith.constant 0 : i32
    %33 = arith.cmpi ne, %32, %c0_i32_16 : i32
    scf.if %33 {
      %c0_17 = arith.constant 0 : index
      %c0_18 = arith.constant 0 : index
      %34 = vector.load %arg8[%c0_17, %c0_18] : memref<4x256xf32, #tpu.memory_space<vmem>>, vector<4x256xf32>
      %cst_19 = arith.constant dense<0.000000e+00> : vector<256xf32>
      %35 = vector.multi_reduction <add>, %34, %cst_19 [0] : vector<4x256xf32> to vector<256xf32>
      %36 = vector.shape_cast %35 : vector<256xf32> to vector<1x256xf32>
      %c0_20 = arith.constant 0 : index
      %c0_21 = arith.constant 0 : index
      %37 = vector.load %arg3[%c0_20, %c0_21] : memref<256x8xf32, #tpu.memory_space<vmem>>, vector<256x8xf32>
      %cst_22 = arith.constant dense<0.000000e+00> : vector<1x8xf32>
      %38 = tpu.matmul %36, %37, %cst_22 {dimension_numbers = #tpu.dot_dimension_numbers<[1], [0], [0], [1], [0, 0, 1, 1], [], []>, precision = #tpu.contract_precision<fp32>} : vector<1x256xf32>, vector<256x8xf32>, vector<1x8xf32> -> vector<1x8xf32>
      %c0_23 = arith.constant 0 : index
      %c0_24 = arith.constant 0 : index
      %39 = vector.load %arg7[%c0_23, %c0_24] : memref<1x8xf32, #tpu.memory_space<vmem>>, vector<1x8xf32>
      tpu.vector_store %arg7[%c0_23, %c0_24], %38 {strides = array<i32>} : memref<1x8xf32, #tpu.memory_space<vmem>>, vector<1x8xf32>,
    } else {
    }
    return
  }
  func.func @transform_0(%arg0: i32, %arg1: i32) -> (i32, i32) {
    %c0_i32 = arith.constant 0 : i32
    %c0_i32_0 = arith.constant 0 : i32
    %c0_i32_1 = arith.constant 0 : i32
    return %c0_i32, %c0_i32_0 : i32, i32
  }
  func.func @transform_1(%arg0: i32, %arg1: i32) -> (i32, i32) {
    %c0_i32 = arith.constant 0 : i32
    %c0_i32_0 = arith.constant 0 : i32
    %c0_i32_1 = arith.constant 0 : i32
    return %c0_i32, %c0_i32_0 : i32, i32
  }
  func.func @transform_2(%arg0: i32, %arg1: i32) -> (i32, i32) {
    %c1_i32 = arith.constant 1 : i32
    %0 = arith.muli %arg0, %c1_i32 : i32
    %1 = arith.addi %0, %arg1 : i32
    %c0_i32 = arith.constant 0 : i32
    %c0_i32_0 = arith.constant 0 : i32
    return %1, %c0_i32 : i32, i32
  }
  func.func @transform_3(%arg0: i32, %arg1: i32) -> (i32, i32) {
    %c1_i32 = arith.constant 1 : i32
    %0 = arith.muli %arg0, %c1_i32 : i32
    %1 = arith.addi %0, %arg1 : i32
    %c0_i32 = arith.constant 0 : i32
    %c0_i32_0 = arith.constant 0 : i32
    return %1, %c0_i32 : i32, i32
  }
  func.func @transform_4(%arg0: i32, %arg1: i32) -> (i32, i32) {
    %c1_i32 = arith.constant 1 : i32
    %0 = arith.muli %arg0, %c1_i32 : i32
    %1 = arith.addi %0, %arg1 : i32
    %c0_i32 = arith.constant 0 : i32
    %c0_i32_0 = arith.constant 0 : i32
    return %1, %c0_i32 : i32, i32
  }
  func.func @transform_5(%arg0: i32, %arg1: i32) -> (i32, i32) {
    %c0_i32 = arith.constant 0 : i32
    %c0_i32_0 = arith.constant 0 : i32
    return %arg0, %c0_i32 : i32, i32
  }
}

</mosaic_0001>

<llo_original>
// kernel: tpu_custom_call.1
$region0: #{tpu_custom_call.1}
  #allocation0 [shape = 'u32[]', space=smem, size = 0x4, offset = 0x4, fixed_abs, tag = 'smem constant byte address 0x4 - core index']
  #allocation1 [shape = 'u32[72,128]{1,0:T(1,128)}', space=vmem, size = 0x9000, scoped, tag = 'internal scratch']
  #allocation2 [shape = 'f32[4,256]{1,0:T(4,128)}', space=vmem, size = 0x1000, scoped, tag = 'scratch operand']
  %s0 = inlined_call_operand.vmem [shape: f32[32,256], index: 0, kind: input, shape index: {}]
  %s1 = inlined_call_operand.vmem [shape: f32[256,8], index: 1, kind: input, shape index: {}]
  %s2 = inlined_call_operand.vmem [shape: f32[4,32], index: 2, kind: input, shape index: {}]
  %s3 = inlined_call_operand.vmem [shape: f32[4,256], index: 3, kind: input, shape index: {}]
  %s4 = inlined_call_operand.vmem [shape: f32[4,256], index: 4, kind: input, shape index: {}]
  %s5 = inlined_call_operand.hbm [shape: f32[1,8], index: 5, kind: output, shape index: {}]
  %s6 = sld [smem:[#allocation0]]
  $region38: #{tpu_custom_call.1} parent=0
    _
  %s8 = ssub.s32 1, %s6
  %s9 = scalar_select 0, %s8, %s6
  $region1: #{tpu_custom_call.1} parent=0
    #allocation3 [shape = 'u8[512]{0}', space=vmem, size = 0x400, scoped, tag = 'output window, operand 0, single buffered']
    #allocation4 [shape = 's32[1]{0}', space=sflag, size = 0x4, scoped, tag = 'scoped memory for tpu_custom_call.1']
    %10 = vsyncpa [#allocation4], 0
    // Predicated region
    $region2: #{tpu_custom_call.1} parent=1 // pred_check
      _
    $region3: #{tpu_custom_call.1} parent=1 // pred_check_branch
      %12 = sbr.rel (0) target = $region5
    $region4: #{tpu_custom_call.1} parent=1 // pred_region
      _
    $region5: #{tpu_custom_call.1} parent=1 // pred_fallthru
      _
    // Predicated region
    $region6: #{tpu_custom_call.1} parent=1 // pred_check
      _
    $region7: #{tpu_custom_call.1} parent=1 // pred_check_branch
      %14 = sbr.rel (0) target = $region9
    $region8: #{tpu_custom_call.1} parent=1 // pred_region
      _
    $region9: #{tpu_custom_call.1} parent=1 // pred_fallthru
      _
    // Predicated region
    $region10: #{tpu_custom_call.1} parent=1 // pred_check
      _
    $region11: #{tpu_custom_call.1} parent=1 // pred_check_branch
      %16 = sbr.rel (0) target = $region13
    $region12: #{tpu_custom_call.1} parent=1 // pred_region
      %s17 = sadd.s32 0, 0
      %p18 = scmp.lt.s32.totalorder %s17, 0
      %s19 = scalar_select %p18, %s17, 0
      %s20 = smul.addr %s19, 4
      %s21 = scalar_lea.vmem %s2, %s20
      %s22 = sadd.s32 0, 0
    $region13: #{tpu_custom_call.1} parent=1 // pred_fallthru
      _
    // Predicated region
    $region14: #{tpu_custom_call.1} parent=1 // pred_check
      _
    $region15: #{tpu_custom_call.1} parent=1 // pred_check_branch
      %24 = sbr.rel (0) target = $region17
    $region16: #{tpu_custom_call.1} parent=1 // pred_region
      %s25 = sadd.s32 0, 0
      %p26 = scmp.lt.s32.totalorder %s25, 0
      %s27 = scalar_select %p26, %s25, 0
      %s28 = smul.addr %s27, 2
      %s29 = smul.addr %s28, 4
      %s30 = scalar_lea.vmem %s3, %s29
      %s31 = sadd.s32 0, 0
    $region17: #{tpu_custom_call.1} parent=1 // pred_fallthru
      _
    // Predicated region
    $region18: #{tpu_custom_call.1} parent=1 // pred_check
      _
    $region19: #{tpu_custom_call.1} parent=1 // pred_check_branch
      %33 = sbr.rel (0) target = $region21
    $region20: #{tpu_custom_call.1} parent=1 // pred_region
      %s34 = sadd.s32 0, 0
      %p35 = scmp.lt.s32.totalorder %s34, 0
      %s36 = scalar_select %p35, %s34, 0
      %s37 = smul.addr %s36, 2
      %s38 = smul.addr %s37, 4
      %s39 = scalar_lea.vmem %s4, %s38
      %s40 = sadd.s32 0, 0
    $region21: #{tpu_custom_call.1} parent=1 // pred_fallthru
      _
    %s41 = sadd.s32 0, 0
    %p42 = scmp.lt.s32.totalorder %s41, 0
    %s43 = scalar_select %p42, %s41, 0
    %s44 = smul.addr %s43, 4
    %s45 = scalar_lea.vmem %s2, %s44
    %s46 = sadd.s32 0, 0
    %p47 = scmp.lt.s32.totalorder %s46, 0
    %s48 = scalar_select %p47, %s46, 0
    %s49 = smul.addr %s48, 2
    %s50 = smul.addr %s49, 4
    %s51 = scalar_lea.vmem %s3, %s50
    %s52 = sadd.s32 0, 0
    %p53 = scmp.lt.s32.totalorder %s52, 0
    %s54 = scalar_select %p53, %s52, 0
    %s55 = smul.addr %s54, 2
    %s56 = smul.addr %s55, 4
    %s57 = scalar_lea.vmem %s4, %s56
    %s58 = sadd.s32 0, 0
    %p59 = scmp.lt.s32.totalorder %s58, 0
    %s60 = scalar_select %p59, %s58, 0
    %s61 = smul.addr %s60, 4
    %s62 = scalar_lea.vmem %s2, %s61
    %s63 = sadd.s32 0, 0
    %s64 = sadd.s32 0, 0
    %p65 = scmp.lt.s32.totalorder %s64, 0
    %s66 = scalar_select %p65, %s64, 0
    %s67 = smul.addr %s66, 2
    %s68 = smul.addr %s67, 4
    %s69 = scalar_lea.vmem %s3, %s68
    %s70 = sadd.s32 0, 0
    %s71 = sadd.s32 0, 0
    %p72 = scmp.lt.s32.totalorder %s71, 0
    %s73 = scalar_select %p72, %s71, 0
    %s74 = smul.addr %s73, 2
    %s75 = smul.addr %s74, 4
    %s76 = scalar_lea.vmem %s4, %s75
    %s77 = sadd.s32 0, 0
    %p78 = scmp.eq.s32.totalorder 0, 0
    // Predicated region
    $region22: #{tpu_custom_call.1} parent=1 // pred_check
      %p79 = pneg %p78
    $region23: #{tpu_custom_call.1} parent=1 // pred_check_branch
      %81 = sbr.rel (%p79) target = $region25
    $region24: #{tpu_custom_call.1} parent=1 // pred_region
      %82 = vst [vmem:[#allocation2] sm:$0xff] 0.0
    $region25: #{tpu_custom_call.1} parent=1 // pred_fallthru
      _
    %v83 = vld [vmem:[%s0] sm:$0xff]
    %v84 = vld [vmem:[%s0 + $0x8] sm:$0xff]
    %v85 = vld [vmem:[%s0 + $0x10] sm:$0xff]
    %v86 = vld [vmem:[%s0 + $0x18] sm:$0xff]
    %v87 = vld [vmem:[%s0 + $0x20] sm:$0xff]
    %v88 = vld [vmem:[%s0 + $0x28] sm:$0xff]
    %v89 = vld [vmem:[%s0 + $0x30] sm:$0xff]
    %v90 = vld [vmem:[%s0 + $0x38] sm:$0xff]
    %v91 = vld [vmem:[%s62] sm:$0xf]
    %s92 = smul.u32 0, 2
    %s93 = smul.addr %s92, 4
    %s94 = scalar_lea.vmem %s69, %s93
    %v95 = vld [vmem:[%s94] sm:$0xff]
    %vm96 = vcmask 261120
    %v98 = vsel %vm96, %v91, 0
    %100 = vmatpush.msra.mxu0 0.0
    %101 = vmatpush.msra.mxu0 0.0
    %102 = vmatpush.msra.mxu0 0.0
    %103 = vmatpush.msra.mxu0 0.0
    %104 = vmatpush.msra.mxu0 0.0
    %105 = vmatpush.msra.mxu0 0.0
    %106 = vmatpush.msra.mxu0 0.0
    %107 = vmatpush.msra.mxu0 0.0
    %108 = vmatpush.msra.mxu0 0.0
    %109 = vmatpush.msra.mxu0 0.0
    %110 = vmatpush.msra.mxu0 0.0
    %111 = vmatpush.msra.mxu0 0.0
    %v112 = vand.u32 %v89, 4294901760
    %113 = vmatpush.msra.mxu0 %v112
    %v114 = vand.u32 %v87, 4294901760
    %115 = vmatpush.msra.mxu0 %v114
    %v116 = vand.u32 %v85, 4294901760
    %117 = vmatpush.msra.mxu0 %v116
    %v118 = vand.u32 %v83, 4294901760
    %119 = vmatpush.msra.mxu0 %v118
    %v120 = vand.u32 %v98, 4294901760
    %v121 = vsub.f32 %v98, %v120
    %v122 = vand.u32 %v121, 4294901760
    %v123 = vsub.f32 %v121, %v122
    %v124 = vand.u32 %v123, 4294901760
    %125 = vmatmul.f32.gmra.mxu0 %v124
    %v126 = vpop.f32.mrf.mxu0
    %v127 = vadd.f32 0.0, %v126
    %128 = vdwg.mxu0
    %129 = vmatpush.msra.mxu0 0.0
    %130 = vmatpush.msra.mxu0 0.0
    %131 = vmatpush.msra.mxu0 0.0
    %132 = vmatpush.msra.mxu0 0.0
    %133 = vmatpush.msra.mxu0 0.0
    %134 = vmatpush.msra.mxu0 0.0
    %135 = vmatpush.msra.mxu0 0.0
    %136 = vmatpush.msra.mxu0 0.0
    %137 = vmatpush.msra.mxu0 0.0
    %138 = vmatpush.msra.mxu0 0.0
    %139 = vmatpush.msra.mxu0 0.0
    %140 = vmatpush.msra.mxu0 0.0
    %v141 = vand.u32 %v89, 4294901760
    %v142 = vsub.f32 %v89, %v141
    %v143 = vand.u32 %v142, 4294901760
    %v144 = vsub.f32 %v142, %v143
    %v145 = vand.u32 %v144, 4294901760
    %146 = vmatpush.msra.mxu0 %v145
    %v147 = vand.u32 %v87, 4294901760
    %v148 = vsub.f32 %v87, %v147
    %v149 = vand.u32 %v148, 4294901760
    %v150 = vsub.f32 %v148, %v149
    %v151 = vand.u32 %v150, 4294901760
    %152 = vmatpush.msra.mxu0 %v151
    %v153 = vand.u32 %v85, 4294901760
    %v154 = vsub.f32 %v85, %v153
    %v155 = vand.u32 %v154, 4294901760
    %v156 = vsub.f32 %v154, %v155
    %v157 = vand.u32 %v156, 4294901760
    %158 = vmatpush.msra.mxu0 %v157
    %v159 = vand.u32 %v83, 4294901760
    %v160 = vsub.f32 %v83, %v159
    %v161 = vand.u32 %v160, 4294901760
    %v162 = vsub.f32 %v160, %v161
    %v163 = vand.u32 %v162, 4294901760
    %164 = vmatpush.msra.mxu0 %v163
    %v165 = vand.u32 %v98, 4294901760
    %166 = vmatmul.f32.gmra.mxu0 %v165
    %v167 = vpop.f32.mrf.mxu0
    %v168 = vadd.f32 %v127, %v167
    %169 = vdwg.mxu0
    %170 = vmatpush.msra.mxu0 0.0
    %171 = vmatpush.msra.mxu0 0.0
    %172 = vmatpush.msra.mxu0 0.0
    %173 = vmatpush.msra.mxu0 0.0
    %174 = vmatpush.msra.mxu0 0.0
    %175 = vmatpush.msra.mxu0 0.0
    %176 = vmatpush.msra.mxu0 0.0
    %177 = vmatpush.msra.mxu0 0.0
    %178 = vmatpush.msra.mxu0 0.0
    %179 = vmatpush.msra.mxu0 0.0
    %180 = vmatpush.msra.mxu0 0.0
    %181 = vmatpush.msra.mxu0 0.0
    %v182 = vand.u32 %v89, 4294901760
    %v183 = vsub.f32 %v89, %v182
    %184 = vmatpush.msra.mxu0 %v183
    %v185 = vand.u32 %v87, 4294901760
    %v186 = vsub.f32 %v87, %v185
    %187 = vmatpush.msra.mxu0 %v186
    %v188 = vand.u32 %v85, 4294901760
    %v189 = vsub.f32 %v85, %v188
    %190 = vmatpush.msra.mxu0 %v189
    %v191 = vand.u32 %v83, 4294901760
    %v192 = vsub.f32 %v83, %v191
    %193 = vmatpush.msra.mxu0 %v192
    %v194 = vand.u32 %v98, 4294901760
    %v195 = vsub.f32 %v98, %v194
    %196 = vmatmul.f32.gmra.mxu0 %v195
    %v197 = vpop.f32.mrf.mxu0
    %v198 = vadd.f32 %v168, %v197
    %199 = vdwg.mxu0
    %200 = vmatpush.msra.mxu0 0.0
    %201 = vmatpush.msra.mxu0 0.0
    %202 = vmatpush.msra.mxu0 0.0
    %203 = vmatpush.msra.mxu0 0.0
    %204 = vmatpush.msra.mxu0 0.0
    %205 = vmatpush.msra.mxu0 0.0
    %206 = vmatpush.msra.mxu0 0.0
    %207 = vmatpush.msra.mxu0 0.0
    %208 = vmatpush.msra.mxu0 0.0
    %209 = vmatpush.msra.mxu0 0.0
    %210 = vmatpush.msra.mxu0 0.0
    %211 = vmatpush.msra.mxu0 0.0
    %v212 = vand.u32 %v89, 4294901760
    %213 = vmatpush.msra.mxu0 %v212
    %v214 = vand.u32 %v87, 4294901760
    %215 = vmatpush.msra.mxu0 %v214
    %v216 = vand.u32 %v85, 4294901760
    %217 = vmatpush.msra.mxu0 %v216
    %v218 = vand.u32 %v83, 4294901760
    %219 = vmatpush.msra.mxu0 %v218
    %v220 = vand.u32 %v98, 4294901760
    %v221 = vsub.f32 %v98, %v220
    %v222 = vand.u32 %v221, 4294901760
    %223 = vmatmul.f32.gmra.mxu0 %v222
    %v224 = vpop.f32.mrf.mxu0
    %v225 = vadd.f32 %v198, %v224
    %226 = vdwg.mxu0
    %227 = vmatpush.msra.mxu0 0.0
    %228 = vmatpush.msra.mxu0 0.0
    %229 = vmatpush.msra.mxu0 0.0
    %230 = vmatpush.msra.mxu0 0.0
    %231 = vmatpush.msra.mxu0 0.0
    %232 = vmatpush.msra.mxu0 0.0
    %233 = vmatpush.msra.mxu0 0.0
    %234 = vmatpush.msra.mxu0 0.0
    %235 = vmatpush.msra.mxu0 0.0
    %236 = vmatpush.msra.mxu0 0.0
    %237 = vmatpush.msra.mxu0 0.0
    %238 = vmatpush.msra.mxu0 0.0
    %v239 = vand.u32 %v89, 4294901760
    %v240 = vsub.f32 %v89, %v239
    %v241 = vand.u32 %v240, 4294901760
    %242 = vmatpush.msra.mxu0 %v241
    %v243 = vand.u32 %v87, 4294901760
    %v244 = vsub.f32 %v87, %v243
    %v245 = vand.u32 %v244, 4294901760
    %246 = vmatpush.msra.mxu0 %v245
    %v247 = vand.u32 %v85, 4294901760
    %v248 = vsub.f32 %v85, %v247
    %v249 = vand.u32 %v248, 4294901760
    %250 = vmatpush.msra.mxu0 %v249
    %v251 = vand.u32 %v83, 4294901760
    %v252 = vsub.f32 %v83, %v251
    %v253 = vand.u32 %v252, 4294901760
    %254 = vmatpush.msra.mxu0 %v253
    %v255 = vand.u32 %v98, 4294901760
    %256 = vmatmul.f32.gmra.mxu0 %v255
    %v257 = vpop.f32.mrf.mxu0
    %v258 = vadd.f32 %v225, %v257
    %259 = vdwg.mxu0
    %260 = vmatpush.msra.mxu0 0.0
    %261 = vmatpush.msra.mxu0 0.0
    %262 = vmatpush.msra.mxu0 0.0
    %263 = vmatpush.msra.mxu0 0.0
    %264 = vmatpush.msra.mxu0 0.0
    %265 = vmatpush.msra.mxu0 0.0
    %266 = vmatpush.msra.mxu0 0.0
    %267 = vmatpush.msra.mxu0 0.0
    %268 = vmatpush.msra.mxu0 0.0
    %269 = vmatpush.msra.mxu0 0.0
    %270 = vmatpush.msra.mxu0 0.0
    %271 = vmatpush.msra.mxu0 0.0
    %v272 = vand.u32 %v89, 4294901760
    %273 = vmatpush.msra.mxu0 %v272
    %v274 = vand.u32 %v87, 4294901760
    %275 = vmatpush.msra.mxu0 %v274
    %v276 = vand.u32 %v85, 4294901760
    %277 = vmatpush.msra.mxu0 %v276
    %v278 = vand.u32 %v83, 4294901760
    %279 = vmatpush.msra.mxu0 %v278
    %v280 = vand.u32 %v98, 4294901760
    %281 = vmatmul.f32.gmra.mxu0 %v280
    %v282 = vpop.f32.mrf.mxu0
    %v283 = vadd.f32 %v258, %v282
    %284 = vdwg.mxu0
    %285 = vmatpush.msra.mxu0 0.0
    %286 = vmatpush.msra.mxu0 0.0
    %287 = vmatpush.msra.mxu0 0.0
    %288 = vmatpush.msra.mxu0 0.0
    %289 = vmatpush.msra.mxu0 0.0
    %290 = vmatpush.msra.mxu0 0.0
    %291 = vmatpush.msra.mxu0 0.0
    %292 = vmatpush.msra.mxu0 0.0
    %293 = vmatpush.msra.mxu0 0.0
    %294 = vmatpush.msra.mxu0 0.0
    %295 = vmatpush.msra.mxu0 0.0
    %296 = vmatpush.msra.mxu0 0.0
    %v297 = vand.u32 %v90, 4294901760
    %298 = vmatpush.msra.mxu0 %v297
    %v299 = vand.u32 %v88, 4294901760
    %300 = vmatpush.msra.mxu0 %v299
    %v301 = vand.u32 %v86, 4294901760
    %302 = vmatpush.msra.mxu0 %v301
    %v303 = vand.u32 %v84, 4294901760
    %304 = vmatpush.msra.mxu0 %v303
    %v305 = vand.u32 %v98, 4294901760
    %v306 = vsub.f32 %v98, %v305
    %v307 = vand.u32 %v306, 4294901760
    %v308 = vsub.f32 %v306, %v307
    %v309 = vand.u32 %v308, 4294901760
    %310 = vmatmul.f32.gmra.mxu0 %v309
    %v311 = vpop.f32.mrf.mxu0
    %v312 = vadd.f32 0.0, %v311
    %313 = vdwg.mxu0
    %314 = vmatpush.msra.mxu0 0.0
    %315 = vmatpush.msra.mxu0 0.0
    %316 = vmatpush.msra.mxu0 0.0
    %317 = vmatpush.msra.mxu0 0.0
    %318 = vmatpush.msra.mxu0 0.0
    %319 = vmatpush.msra.mxu0 0.0
    %320 = vmatpush.msra.mxu0 0.0
    %321 = vmatpush.msra.mxu0 0.0
    %322 = vmatpush.msra.mxu0 0.0
    %323 = vmatpush.msra.mxu0 0.0
    %324 = vmatpush.msra.mxu0 0.0
    %325 = vmatpush.msra.mxu0 0.0
    %v326 = vand.u32 %v90, 4294901760
    %v327 = vsub.f32 %v90, %v326
    %v328 = vand.u32 %v327, 4294901760
    %v329 = vsub.f32 %v327, %v328
    %v330 = vand.u32 %v329, 4294901760
    %331 = vmatpush.msra.mxu0 %v330
    %v332 = vand.u32 %v88, 4294901760
    %v333 = vsub.f32 %v88, %v332
    %v334 = vand.u32 %v333, 4294901760
    %v335 = vsub.f32 %v333, %v334
    %v336 = vand.u32 %v335, 4294901760
    %337 = vmatpush.msra.mxu0 %v336
    %v338 = vand.u32 %v86, 4294901760
    %v339 = vsub.f32 %v86, %v338
    %v340 = vand.u32 %v339, 4294901760
    %v341 = vsub.f32 %v339, %v340
    %v342 = vand.u32 %v341, 4294901760
    %343 = vmatpush.msra.mxu0 %v342
    %v344 = vand.u32 %v84, 4294901760
    %v345 = vsub.f32 %v84, %v344
    %v346 = vand.u32 %v345, 4294901760
    %v347 = vsub.f32 %v345, %v346
    %v348 = vand.u32 %v347, 4294901760
    %349 = vmatpush.msra.mxu0 %v348
    %v350 = vand.u32 %v98, 4294901760
    %351 = vmatmul.f32.gmra.mxu0 %v350
    %v352 = vpop.f32.mrf.mxu0
    %v353 = vadd.f32 %v312, %v352
    %354 = vdwg.mxu0
    %355 = vmatpush.msra.mxu0 0.0
    %356 = vmatpush.msra.mxu0 0.0
    %357 = vmatpush.msra.mxu0 0.0
    %358 = vmatpush.msra.mxu0 0.0
    %359 = vmatpush.msra.mxu0 0.0
    %360 = vmatpush.msra.mxu0 0.0
    %361 = vmatpush.msra.mxu0 0.0
    %362 = vmatpush.msra.mxu0 0.0
    %363 = vmatpush.msra.mxu0 0.0
    %364 = vmatpush.msra.mxu0 0.0
    %365 = vmatpush.msra.mxu0 0.0
    %366 = vmatpush.msra.mxu0 0.0
    %v367 = vand.u32 %v90, 4294901760
    %v368 = vsub.f32 %v90, %v367
    %369 = vmatpush.msra.mxu0 %v368
    %v370 = vand.u32 %v88, 4294901760
    %v371 = vsub.f32 %v88, %v370
    %372 = vmatpush.msra.mxu0 %v371
    %v373 = vand.u32 %v86, 4294901760
    %v374 = vsub.f32 %v86, %v373
    %375 = vmatpush.msra.mxu0 %v374
    %v376 = vand.u32 %v84, 4294901760
    %v377 = vsub.f32 %v84, %v376
    %378 = vmatpush.msra.mxu0 %v377
    %v379 = vand.u32 %v98, 4294901760
    %v380 = vsub.f32 %v98, %v379
    %381 = vmatmul.f32.gmra.mxu0 %v380
    %v382 = vpop.f32.mrf.mxu0
    %v383 = vadd.f32 %v353, %v382
    %384 = vdwg.mxu0
    %385 = vmatpush.msra.mxu0 0.0
    %386 = vmatpush.msra.mxu0 0.0
    %387 = vmatpush.msra.mxu0 0.0
    %388 = vmatpush.msra.mxu0 0.0
    %389 = vmatpush.msra.mxu0 0.0
    %390 = vmatpush.msra.mxu0 0.0
    %391 = vmatpush.msra.mxu0 0.0
    %392 = vmatpush.msra.mxu0 0.0
    %393 = vmatpush.msra.mxu0 0.0
    %394 = vmatpush.msra.mxu0 0.0
    %395 = vmatpush.msra.mxu0 0.0
    %396 = vmatpush.msra.mxu0 0.0
    %v397 = vand.u32 %v90, 4294901760
    %398 = vmatpush.msra.mxu0 %v397
    %v399 = vand.u32 %v88, 4294901760
    %400 = vmatpush.msra.mxu0 %v399
    %v401 = vand.u32 %v86, 4294901760
    %402 = vmatpush.msra.mxu0 %v401
    %v403 = vand.u32 %v84, 4294901760
    %404 = vmatpush.msra.mxu0 %v403
    %v405 = vand.u32 %v98, 4294901760
    %v406 = vsub.f32 %v98, %v405
    %v407 = vand.u32 %v406, 4294901760
    %408 = vmatmul.f32.gmra.mxu0 %v407
    %v409 = vpop.f32.mrf.mxu0
    %v410 = vadd.f32 %v383, %v409
    %411 = vdwg.mxu0
    %412 = vmatpush.msra.mxu0 0.0
    %413 = vmatpush.msra.mxu0 0.0
    %414 = vmatpush.msra.mxu0 0.0
    %415 = vmatpush.msra.mxu0 0.0
    %416 = vmatpush.msra.mxu0 0.0
    %417 = vmatpush.msra.mxu0 0.0
    %418 = vmatpush.msra.mxu0 0.0
    %419 = vmatpush.msra.mxu0 0.0
    %420 = vmatpush.msra.mxu0 0.0
    %421 = vmatpush.msra.mxu0 0.0
    %422 = vmatpush.msra.mxu0 0.0
    %423 = vmatpush.msra.mxu0 0.0
    %v424 = vand.u32 %v90, 4294901760
    %v425 = vsub.f32 %v90, %v424
    %v426 = vand.u32 %v425, 4294901760
    %427 = vmatpush.msra.mxu0 %v426
    %v428 = vand.u32 %v88, 4294901760
    %v429 = vsub.f32 %v88, %v428
    %v430 = vand.u32 %v429, 4294901760
    %431 = vmatpush.msra.mxu0 %v430
    %v432 = vand.u32 %v86, 4294901760
    %v433 = vsub.f32 %v86, %v432
    %v434 = vand.u32 %v433, 4294901760
    %435 = vmatpush.msra.mxu0 %v434
    %v436 = vand.u32 %v84, 4294901760
    %v437 = vsub.f32 %v84, %v436
    %v438 = vand.u32 %v437, 4294901760
    %439 = vmatpush.msra.mxu0 %v438
    %v440 = vand.u32 %v98, 4294901760
    %441 = vmatmul.f32.gmra.mxu0 %v440
    %v442 = vpop.f32.mrf.mxu0
    %v443 = vadd.f32 %v410, %v442
    %444 = vdwg.mxu0
    %445 = vmatpush.msra.mxu0 0.0
    %446 = vmatpush.msra.mxu0 0.0
    %447 = vmatpush.msra.mxu0 0.0
    %448 = vmatpush.msra.mxu0 0.0
    %449 = vmatpush.msra.mxu0 0.0
    %450 = vmatpush.msra.mxu0 0.0
    %451 = vmatpush.msra.mxu0 0.0
    %452 = vmatpush.msra.mxu0 0.0
    %453 = vmatpush.msra.mxu0 0.0
    %454 = vmatpush.msra.mxu0 0.0
    %455 = vmatpush.msra.mxu0 0.0
    %456 = vmatpush.msra.mxu0 0.0
    %v457 = vand.u32 %v90, 4294901760
    %458 = vmatpush.msra.mxu0 %v457
    %v459 = vand.u32 %v88, 4294901760
    %460 = vmatpush.msra.mxu0 %v459
    %v461 = vand.u32 %v86, 4294901760
    %462 = vmatpush.msra.mxu0 %v461
    %v463 = vand.u32 %v84, 4294901760
    %464 = vmatpush.msra.mxu0 %v463
    %v465 = vand.u32 %v98, 4294901760
    %466 = vmatmul.f32.gmra.mxu0 %v465
    %v467 = vpop.f32.mrf.mxu0
    %v468 = vadd.f32 %v443, %v467
    %469 = vdwg.mxu0
    %471 = vst [vmem:[#allocation1] ss:$2 sm:$0xff] %v95
    %v472 = vld.sshfl [vmem:[#allocation1] sm:$0xff pattern:$0x75316420]
    %v473 = vld.sshfl [vmem:[#allocation1 + $0x8] sm:$0xff pattern:$0x75316420]
    %v476 = vsub.f32 %v283, %v472
    %v477 = vsub.f32 %v468, %v473
    %v478 = vand.u32 2147483647, %v476
    %v479 = vand.u32 2147483647, %v477
    %vm480 = vcmp.lt.f32.partialorder %v478, 1.0
    %vm481 = vcmp.lt.f32.partialorder %v479, 1.0
    %v482 = vmul.f32 %v476, 0.5
    %v483 = vmul.f32 %v477, 0.5
    %v484 = vmul.f32 %v482, %v476
    %v485 = vmul.f32 %v483, %v477
    %v486 = vsub.f32 %v478, 0.5
    %v487 = vsub.f32 %v479, 0.5
    %v488 = vsel %vm480, %v484, %v486
    %v489 = vsel %vm481, %v485, %v487
    %s490 = smul.addr %s92, 4
    %s491 = scalar_lea.vmem %s76, %s490
    %v492 = vld [vmem:[%s491] sm:$0xff]
    %494 = vst [vmem:[#allocation1] ss:$2 sm:$0xff] %v492
    %v495 = vld.sshfl [vmem:[#allocation1] sm:$0xff pattern:$0x75316420]
    %v496 = vld.sshfl [vmem:[#allocation1 + $0x8] sm:$0xff pattern:$0x75316420]
    %v499 = vmul.f32 %v488, %v495
    %v500 = vmul.f32 %v489, %v496
    %v501 = vadd.f32 %v499, 0.0
    %v502 = vadd.f32 %v500, 0.0
    %v503 = vadd.f32 %v501, 0.0
    %v504 = vadd.f32 %v502, 0.0
    %v505 = vld [vmem:[#allocation2] sm:$0xff]
    %v508 = vrot.slane %v504, 4
    %vm509 = vcmask 1043456
    %v510 = vsel %vm509, %v503, %v508
    %v512 = vadd.f32 %v505, %v510
    %513 = vst [vmem:[#allocation2] sm:$0xff] %v512
    // Predicated region
    $region26: #{tpu_custom_call.1} parent=1 // pred_check
      %p514 = pneg %p78
    $region27: #{tpu_custom_call.1} parent=1 // pred_check_branch
      %516 = sbr.rel (%p514) target = $region29
    $region28: #{tpu_custom_call.1} parent=1 // pred_region
      %v517 = vld [vmem:[#allocation2] sm:$0xff]
      %519 = vst [vmem:[#allocation1] ss:$2 sm:$0xff] %v517
      %v520 = vld.sshfl [vmem:[#allocation1] sm:$0xff pattern:$0x75316420]
      %v521 = vld.sshfl [vmem:[#allocation1 + $0x8] sm:$0xff pattern:$0x75316420]
      %v524 = vsel %vm509, %v520, 0.0
      %v525 = vrot.slane %v524, 4
      %v526 = vadd.f32 %v524, %v525
      %v527 = vrot.slane %v526, 2
      %v528 = vadd.f32 %v526, %v527
      %v529 = vrot.slane %v528, 1
      %v530 = vadd.f32 %v528, %v529
      %v531 = vsel %vm509, %v521, 0.0
      %v532 = vrot.slane %v531, 4
      %v533 = vadd.f32 %v531, %v532
      %v534 = vrot.slane %v533, 2
      %v535 = vadd.f32 %v533, %v534
      %v536 = vrot.slane %v535, 1
      %v537 = vadd.f32 %v535, %v536
      %v538 = vld [vmem:[%s1] sm:$0xff]
      %v539 = vld [vmem:[%s1 + $0x8] sm:$0xff]
      %v540 = vld [vmem:[%s1 + $0x10] sm:$0xff]
      %v541 = vld [vmem:[%s1 + $0x18] sm:$0xff]
      %v542 = vld [vmem:[%s1 + $0x20] sm:$0xff]
      %v543 = vld [vmem:[%s1 + $0x28] sm:$0xff]
      %v544 = vld [vmem:[%s1 + $0x30] sm:$0xff]
      %v545 = vld [vmem:[%s1 + $0x38] sm:$0xff]
      %v546 = vld [vmem:[%s1 + $0x40] sm:$0xff]
      %v547 = vld [vmem:[%s1 + $0x48] sm:$0xff]
      %v548 = vld [vmem:[%s1 + $0x50] sm:$0xff]
      %v549 = vld [vmem:[%s1 + $0x58] sm:$0xff]
      %v550 = vld [vmem:[%s1 + $0x60] sm:$0xff]
      %v551 = vld [vmem:[%s1 + $0x68] sm:$0xff]
      %v552 = vld [vmem:[%s1 + $0x70] sm:$0xff]
      %v553 = vld [vmem:[%s1 + $0x78] sm:$0xff]
      %v554 = vld [vmem:[%s1 + $0x80] sm:$0xff]
      %v555 = vld [vmem:[%s1 + $0x88] sm:$0xff]
      %v556 = vld [vmem:[%s1 + $0x90] sm:$0xff]
      %v557 = vld [vmem:[%s1 + $0x98] sm:$0xff]
      %v558 = vld [vmem:[%s1 + $0xa0] sm:$0xff]
      %v559 = vld [vmem:[%s1 + $0xa8] sm:$0xff]
      %v560 = vld [vmem:[%s1 + $0xb0] sm:$0xff]
      %v561 = vld [vmem:[%s1 + $0xb8] sm:$0xff]
      %v562 = vld [vmem:[%s1 + $0xc0] sm:$0xff]
      %v563 = vld [vmem:[%s1 + $0xc8] sm:$0xff]
      %v564 = vld [vmem:[%s1 + $0xd0] sm:$0xff]
      %v565 = vld [vmem:[%s1 + $0xd8] sm:$0xff]
      %v566 = vld [vmem:[%s1 + $0xe0] sm:$0xff]
      %v567 = vld [vmem:[%s1 + $0xe8] sm:$0xff]
      %v568 = vld [vmem:[%s1 + $0xf0] sm:$0xff]
      %v569 = vld [vmem:[%s1 + $0xf8] sm:$0xff]
      %v570 = vand.u32 %v553, 4294901760
      %571 = vmatpush.msra.mxu0 %v570
      %v572 = vand.u32 %v552, 4294901760
      %573 = vmatpush.msra.mxu0 %v572
      %v574 = vand.u32 %v551, 4294901760
      %575 = vmatpush.msra.mxu0 %v574
      %v576 = vand.u32 %v550, 4294901760
      %577 = vmatpush.msra.mxu0 %v576
      %v578 = vand.u32 %v549, 4294901760
      %579 = vmatpush.msra.mxu0 %v578
      %v580 = vand.u32 %v548, 4294901760
      %581 = vmatpush.msra.mxu0 %v580
      %v582 = vand.u32 %v547, 4294901760
      %583 = vmatpush.msra.mxu0 %v582
      %v584 = vand.u32 %v546, 4294901760
      %585 = vmatpush.msra.mxu0 %v584
      %v586 = vand.u32 %v545, 4294901760
      %587 = vmatpush.msra.mxu0 %v586
      %v588 = vand.u32 %v544, 4294901760
      %589 = vmatpush.msra.mxu0 %v588
      %v590 = vand.u32 %v543, 4294901760
      %591 = vmatpush.msra.mxu0 %v590
      %v592 = vand.u32 %v542, 4294901760
      %593 = vmatpush.msra.mxu0 %v592
      %v594 = vand.u32 %v541, 4294901760
      %595 = vmatpush.msra.mxu0 %v594
      %v596 = vand.u32 %v540, 4294901760
      %597 = vmatpush.msra.mxu0 %v596
      %v598 = vand.u32 %v539, 4294901760
      %599 = vmatpush.msra.mxu0 %v598
      %v600 = vand.u32 %v538, 4294901760
      %601 = vmatpush.msra.mxu0 %v600
      %v602 = vand.u32 %v530, 4294901760
      %v603 = vsub.f32 %v530, %v602
      %v604 = vand.u32 %v603, 4294901760
      %v605 = vsub.f32 %v603, %v604
      %v606 = vand.u32 %v605, 4294901760
      %607 = vmatmul.f32.gmra.mxu0 %v606
      %v608 = vpop.f32.mrf.mxu0
      %v609 = vadd.f32 0.0, %v608
      %610 = vdwg.mxu0
      %v611 = vand.u32 %v553, 4294901760
      %v612 = vsub.f32 %v553, %v611
      %v613 = vand.u32 %v612, 4294901760
      %v614 = vsub.f32 %v612, %v613
      %v615 = vand.u32 %v614, 4294901760
      %616 = vmatpush.msra.mxu0 %v615
      %v617 = vand.u32 %v552, 4294901760
      %v618 = vsub.f32 %v552, %v617
      %v619 = vand.u32 %v618, 4294901760
      %v620 = vsub.f32 %v618, %v619
      %v621 = vand.u32 %v620, 4294901760
      %622 = vmatpush.msra.mxu0 %v621
      %v623 = vand.u32 %v551, 4294901760
      %v624 = vsub.f32 %v551, %v623
      %v625 = vand.u32 %v624, 4294901760
      %v626 = vsub.f32 %v624, %v625
      %v627 = vand.u32 %v626, 4294901760
      %628 = vmatpush.msra.mxu0 %v627
      %v629 = vand.u32 %v550, 4294901760
      %v630 = vsub.f32 %v550, %v629
      %v631 = vand.u32 %v630, 4294901760
      %v632 = vsub.f32 %v630, %v631
      %v633 = vand.u32 %v632, 4294901760
      %634 = vmatpush.msra.mxu0 %v633
      %v635 = vand.u32 %v549, 4294901760
      %v636 = vsub.f32 %v549, %v635
      %v637 = vand.u32 %v636, 4294901760
      %v638 = vsub.f32 %v636, %v637
      %v639 = vand.u32 %v638, 4294901760
      %640 = vmatpush.msra.mxu0 %v639
      %v641 = vand.u32 %v548, 4294901760
      %v642 = vsub.f32 %v548, %v641
      %v643 = vand.u32 %v642, 4294901760
      %v644 = vsub.f32 %v642, %v643
      %v645 = vand.u32 %v644, 4294901760
      %646 = vmatpush.msra.mxu0 %v645
      %v647 = vand.u32 %v547, 4294901760
      %v648 = vsub.f32 %v547, %v647
      %v649 = vand.u32 %v648, 4294901760
      %v650 = vsub.f32 %v648, %v649
      %v651 = vand.u32 %v650, 4294901760
      %652 = vmatpush.msra.mxu0 %v651
      %v653 = vand.u32 %v546, 4294901760
      %v654 = vsub.f32 %v546, %v653
      %v655 = vand.u32 %v654, 4294901760
      %v656 = vsub.f32 %v654, %v655
      %v657 = vand.u32 %v656, 4294901760
      %658 = vmatpush.msra.mxu0 %v657
      %v659 = vand.u32 %v545, 4294901760
      %v660 = vsub.f32 %v545, %v659
      %v661 = vand.u32 %v660, 4294901760
      %v662 = vsub.f32 %v660, %v661
      %v663 = vand.u32 %v662, 4294901760
      %664 = vmatpush.msra.mxu0 %v663
      %v665 = vand.u32 %v544, 4294901760
      %v666 = vsub.f32 %v544, %v665
      %v667 = vand.u32 %v666, 4294901760
      %v668 = vsub.f32 %v666, %v667
      %v669 = vand.u32 %v668, 4294901760
      %670 = vmatpush.msra.mxu0 %v669
      %v671 = vand.u32 %v543, 4294901760
      %v672 = vsub.f32 %v543, %v671
      %v673 = vand.u32 %v672, 4294901760
      %v674 = vsub.f32 %v672, %v673
      %v675 = vand.u32 %v674, 4294901760
      %676 = vmatpush.msra.mxu0 %v675
      %v677 = vand.u32 %v542, 4294901760
      %v678 = vsub.f32 %v542, %v677
      %v679 = vand.u32 %v678, 4294901760
      %v680 = vsub.f32 %v678, %v679
      %v681 = vand.u32 %v680, 4294901760
      %682 = vmatpush.msra.mxu0 %v681
      %v683 = vand.u32 %v541, 4294901760
      %v684 = vsub.f32 %v541, %v683
      %v685 = vand.u32 %v684, 4294901760
      %v686 = vsub.f32 %v684, %v685
      %v687 = vand.u32 %v686, 4294901760
      %688 = vmatpush.msra.mxu0 %v687
      %v689 = vand.u32 %v540, 4294901760
      %v690 = vsub.f32 %v540, %v689
      %v691 = vand.u32 %v690, 4294901760
      %v692 = vsub.f32 %v690, %v691
      %v693 = vand.u32 %v692, 4294901760
      %694 = vmatpush.msra.mxu0 %v693
      %v695 = vand.u32 %v539, 4294901760
      %v696 = vsub.f32 %v539, %v695
      %v697 = vand.u32 %v696, 4294901760
      %v698 = vsub.f32 %v696, %v697
      %v699 = vand.u32 %v698, 4294901760
      %700 = vmatpush.msra.mxu0 %v699
      %v701 = vand.u32 %v538, 4294901760
      %v702 = vsub.f32 %v538, %v701
      %v703 = vand.u32 %v702, 4294901760
      %v704 = vsub.f32 %v702, %v703
      %v705 = vand.u32 %v704, 4294901760
      %706 = vmatpush.msra.mxu0 %v705
      %v707 = vand.u32 %v530, 4294901760
      %708 = vmatmul.f32.gmra.mxu0 %v707
      %v709 = vpop.f32.mrf.mxu0
      %v710 = vadd.f32 %v609, %v709
      %711 = vdwg.mxu0
      %v712 = vand.u32 %v553, 4294901760
      %v713 = vsub.f32 %v553, %v712
      %714 = vmatpush.msra.mxu0 %v713
      %v715 = vand.u32 %v552, 4294901760
      %v716 = vsub.f32 %v552, %v715
      %717 = vmatpush.msra.mxu0 %v716
      %v718 = vand.u32 %v551, 4294901760
      %v719 = vsub.f32 %v551, %v718
      %720 = vmatpush.msra.mxu0 %v719
      %v721 = vand.u32 %v550, 4294901760
      %v722 = vsub.f32 %v550, %v721
      %723 = vmatpush.msra.mxu0 %v722
      %v724 = vand.u32 %v549, 4294901760
      %v725 = vsub.f32 %v549, %v724
      %726 = vmatpush.msra.mxu0 %v725
      %v727 = vand.u32 %v548, 4294901760
      %v728 = vsub.f32 %v548, %v727
      %729 = vmatpush.msra.mxu0 %v728
      %v730 = vand.u32 %v547, 4294901760
      %v731 = vsub.f32 %v547, %v730
      %732 = vmatpush.msra.mxu0 %v731
      %v733 = vand.u32 %v546, 4294901760
      %v734 = vsub.f32 %v546, %v733
      %735 = vmatpush.msra.mxu0 %v734
      %v736 = vand.u32 %v545, 4294901760
      %v737 = vsub.f32 %v545, %v736
      %738 = vmatpush.msra.mxu0 %v737
      %v739 = vand.u32 %v544, 4294901760
      %v740 = vsub.f32 %v544, %v739
      %741 = vmatpush.msra.mxu0 %v740
      %v742 = vand.u32 %v543, 4294901760
      %v743 = vsub.f32 %v543, %v742
      %744 = vmatpush.msra.mxu0 %v743
      %v745 = vand.u32 %v542, 4294901760
      %v746 = vsub.f32 %v542, %v745
      %747 = vmatpush.msra.mxu0 %v746
      %v748 = vand.u32 %v541, 4294901760
      %v749 = vsub.f32 %v541, %v748
      %750 = vmatpush.msra.mxu0 %v749
      %v751 = vand.u32 %v540, 4294901760
      %v752 = vsub.f32 %v540, %v751
      %753 = vmatpush.msra.mxu0 %v752
      %v754 = vand.u32 %v539, 4294901760
      %v755 = vsub.f32 %v539, %v754
      %756 = vmatpush.msra.mxu0 %v755
      %v757 = vand.u32 %v538, 4294901760
      %v758 = vsub.f32 %v538, %v757
      %759 = vmatpush.msra.mxu0 %v758
      %v760 = vand.u32 %v530, 4294901760
      %v761 = vsub.f32 %v530, %v760
      %762 = vmatmul.f32.gmra.mxu0 %v761
      %v763 = vpop.f32.mrf.mxu0
      %v764 = vadd.f32 %v710, %v763
      %765 = vdwg.mxu0
      %v766 = vand.u32 %v553, 4294901760
      %767 = vmatpush.msra.mxu0 %v766
      %v768 = vand.u32 %v552, 4294901760
      %769 = vmatpush.msra.mxu0 %v768
      %v770 = vand.u32 %v551, 4294901760
      %771 = vmatpush.msra.mxu0 %v770
      %v772 = vand.u32 %v550, 4294901760
      %773 = vmatpush.msra.mxu0 %v772
      %v774 = vand.u32 %v549, 4294901760
      %775 = vmatpush.msra.mxu0 %v774
      %v776 = vand.u32 %v548, 4294901760
      %777 = vmatpush.msra.mxu0 %v776
      %v778 = vand.u32 %v547, 4294901760
      %779 = vmatpush.msra.mxu0 %v778
      %v780 = vand.u32 %v546, 4294901760
      %781 = vmatpush.msra.mxu0 %v780
      %v782 = vand.u32 %v545, 4294901760
      %783 = vmatpush.msra.mxu0 %v782
      %v784 = vand.u32 %v544, 4294901760
      %785 = vmatpush.msra.mxu0 %v784
      %v786 = vand.u32 %v543, 4294901760
      %787 = vmatpush.msra.mxu0 %v786
      %v788 = vand.u32 %v542, 4294901760
      %789 = vmatpush.msra.mxu0 %v788
      %v790 = vand.u32 %v541, 4294901760
      %791 = vmatpush.msra.mxu0 %v790
      %v792 = vand.u32 %v540, 4294901760
      %793 = vmatpush.msra.mxu0 %v792
      %v794 = vand.u32 %v539, 4294901760
      %795 = vmatpush.msra.mxu0 %v794
      %v796 = vand.u32 %v538, 4294901760
      %797 = vmatpush.msra.mxu0 %v796
      %v798 = vand.u32 %v530, 4294901760
      %v799 = vsub.f32 %v530, %v798
      %v800 = vand.u32 %v799, 4294901760
      %801 = vmatmul.f32.gmra.mxu0 %v800
      %v802 = vpop.f32.mrf.mxu0
      %v803 = vadd.f32 %v764, %v802
      %804 = vdwg.mxu0
      %v805 = vand.u32 %v553, 4294901760
      %v806 = vsub.f32 %v553, %v805
      %v807 = vand.u32 %v806, 4294901760
      %808 = vmatpush.msra.mxu0 %v807
      %v809 = vand.u32 %v552, 4294901760
      %v810 = vsub.f32 %v552, %v809
      %v811 = vand.u32 %v810, 4294901760
      %812 = vmatpush.msra.mxu0 %v811
      %v813 = vand.u32 %v551, 4294901760
      %v814 = vsub.f32 %v551, %v813
      %v815 = vand.u32 %v814, 4294901760
      %816 = vmatpush.msra.mxu0 %v815
      %v817 = vand.u32 %v550, 4294901760
      %v818 = vsub.f32 %v550, %v817
      %v819 = vand.u32 %v818, 4294901760
      %820 = vmatpush.msra.mxu0 %v819
      %v821 = vand.u32 %v549, 4294901760
      %v822 = vsub.f32 %v549, %v821
      %v823 = vand.u32 %v822, 4294901760
      %824 = vmatpush.msra.mxu0 %v823
      %v825 = vand.u32 %v548, 4294901760
      %v826 = vsub.f32 %v548, %v825
      %v827 = vand.u32 %v826, 4294901760
      %828 = vmatpush.msra.mxu0 %v827
      %v829 = vand.u32 %v547, 4294901760
      %v830 = vsub.f32 %v547, %v829
      %v831 = vand.u32 %v830, 4294901760
      %832 = vmatpush.msra.mxu0 %v831
      %v833 = vand.u32 %v546, 4294901760
      %v834 = vsub.f32 %v546, %v833
      %v835 = vand.u32 %v834, 4294901760
      %836 = vmatpush.msra.mxu0 %v835
      %v837 = vand.u32 %v545, 4294901760
      %v838 = vsub.f32 %v545, %v837
      %v839 = vand.u32 %v838, 4294901760
      %840 = vmatpush.msra.mxu0 %v839
      %v841 = vand.u32 %v544, 4294901760
      %v842 = vsub.f32 %v544, %v841
      %v843 = vand.u32 %v842, 4294901760
      %844 = vmatpush.msra.mxu0 %v843
      %v845 = vand.u32 %v543, 4294901760
      %v846 = vsub.f32 %v543, %v845
      %v847 = vand.u32 %v846, 4294901760
      %848 = vmatpush.msra.mxu0 %v847
      %v849 = vand.u32 %v542, 4294901760
      %v850 = vsub.f32 %v542, %v849
      %v851 = vand.u32 %v850, 4294901760
      %852 = vmatpush.msra.mxu0 %v851
      %v853 = vand.u32 %v541, 4294901760
      %v854 = vsub.f32 %v541, %v853
      %v855 = vand.u32 %v854, 4294901760
      %856 = vmatpush.msra.mxu0 %v855
      %v857 = vand.u32 %v540, 4294901760
      %v858 = vsub.f32 %v540, %v857
      %v859 = vand.u32 %v858, 4294901760
      %860 = vmatpush.msra.mxu0 %v859
      %v861 = vand.u32 %v539, 4294901760
      %v862 = vsub.f32 %v539, %v861
      %v863 = vand.u32 %v862, 4294901760
      %864 = vmatpush.msra.mxu0 %v863
      %v865 = vand.u32 %v538, 4294901760
      %v866 = vsub.f32 %v538, %v865
      %v867 = vand.u32 %v866, 4294901760
      %868 = vmatpush.msra.mxu0 %v867
      %v869 = vand.u32 %v530, 4294901760
      %870 = vmatmul.f32.gmra.mxu0 %v869
      %v871 = vpop.f32.mrf.mxu0
      %v872 = vadd.f32 %v803, %v871
      %873 = vdwg.mxu0
      %v874 = vand.u32 %v553, 4294901760
      %875 = vmatpush.msra.mxu0 %v874
      %v876 = vand.u32 %v552, 4294901760
      %877 = vmatpush.msra.mxu0 %v876
      %v878 = vand.u32 %v551, 4294901760
      %879 = vmatpush.msra.mxu0 %v878
      %v880 = vand.u32 %v550, 4294901760
      %881 = vmatpush.msra.mxu0 %v880
      %v882 = vand.u32 %v549, 4294901760
      %883 = vmatpush.msra.mxu0 %v882
      %v884 = vand.u32 %v548, 4294901760
      %885 = vmatpush.msra.mxu0 %v884
      %v886 = vand.u32 %v547, 4294901760
      %887 = vmatpush.msra.mxu0 %v886
      %v888 = vand.u32 %v546, 4294901760
      %889 = vmatpush.msra.mxu0 %v888
      %v890 = vand.u32 %v545, 4294901760
      %891 = vmatpush.msra.mxu0 %v890
      %v892 = vand.u32 %v544, 4294901760
      %893 = vmatpush.msra.mxu0 %v892
      %v894 = vand.u32 %v543, 4294901760
      %895 = vmatpush.msra.mxu0 %v894
      %v896 = vand.u32 %v542, 4294901760
      %897 = vmatpush.msra.mxu0 %v896
      %v898 = vand.u32 %v541, 4294901760
      %899 = vmatpush.msra.mxu0 %v898
      %v900 = vand.u32 %v540, 4294901760
      %901 = vmatpush.msra.mxu0 %v900
      %v902 = vand.u32 %v539, 4294901760
      %903 = vmatpush.msra.mxu0 %v902
      %v904 = vand.u32 %v538, 4294901760
      %905 = vmatpush.msra.mxu0 %v904
      %v906 = vand.u32 %v530, 4294901760
      %907 = vmatmul.f32.gmra.mxu0 %v906
      %v908 = vpop.f32.mrf.mxu0
      %v909 = vadd.f32 %v872, %v908
      %910 = vdwg.mxu0
      %v911 = vand.u32 %v569, 4294901760
      %912 = vmatpush.msra.mxu0 %v911
      %v913 = vand.u32 %v568, 4294901760
      %914 = vmatpush.msra.mxu0 %v913
      %v915 = vand.u32 %v567, 4294901760
      %916 = vmatpush.msra.mxu0 %v915
      %v917 = vand.u32 %v566, 4294901760
      %918 = vmatpush.msra.mxu0 %v917
      %v919 = vand.u32 %v565, 4294901760
      %920 = vmatpush.msra.mxu0 %v919
      %v921 = vand.u32 %v564, 4294901760
      %922 = vmatpush.msra.mxu0 %v921
      %v923 = vand.u32 %v563, 4294901760
      %924 = vmatpush.msra.mxu0 %v923
      %v925 = vand.u32 %v562, 4294901760
      %926 = vmatpush.msra.mxu0 %v925
      %v927 = vand.u32 %v561, 4294901760
      %928 = vmatpush.msra.mxu0 %v927
      %v929 = vand.u32 %v560, 4294901760
      %930 = vmatpush.msra.mxu0 %v929
      %v931 = vand.u32 %v559, 4294901760
      %932 = vmatpush.msra.mxu0 %v931
      %v933 = vand.u32 %v558, 4294901760
      %934 = vmatpush.msra.mxu0 %v933
      %v935 = vand.u32 %v557, 4294901760
      %936 = vmatpush.msra.mxu0 %v935
      %v937 = vand.u32 %v556, 4294901760
      %938 = vmatpush.msra.mxu0 %v937
      %v939 = vand.u32 %v555, 4294901760
      %940 = vmatpush.msra.mxu0 %v939
      %v941 = vand.u32 %v554, 4294901760
      %942 = vmatpush.msra.mxu0 %v941
      %v943 = vand.u32 %v537, 4294901760
      %v944 = vsub.f32 %v537, %v943
      %v945 = vand.u32 %v944, 4294901760
      %v946 = vsub.f32 %v944, %v945
      %v947 = vand.u32 %v946, 4294901760
      %948 = vmatmul.f32.gmra.mxu0 %v947
      %v949 = vpop.f32.mrf.mxu0
      %v950 = vadd.f32 %v909, %v949
      %951 = vdwg.mxu0
      %v952 = vand.u32 %v569, 4294901760
      %v953 = vsub.f32 %v569, %v952
      %v954 = vand.u32 %v953, 4294901760
      %v955 = vsub.f32 %v953, %v954
      %v956 = vand.u32 %v955, 4294901760
      %957 = vmatpush.msra.mxu0 %v956
      %v958 = vand.u32 %v568, 4294901760
      %v959 = vsub.f32 %v568, %v958
      %v960 = vand.u32 %v959, 4294901760
      %v961 = vsub.f32 %v959, %v960
      %v962 = vand.u32 %v961, 4294901760
      %963 = vmatpush.msra.mxu0 %v962
      %v964 = vand.u32 %v567, 4294901760
      %v965 = vsub.f32 %v567, %v964
      %v966 = vand.u32 %v965, 4294901760
      %v967 = vsub.f32 %v965, %v966
      %v968 = vand.u32 %v967, 4294901760
      %969 = vmatpush.msra.mxu0 %v968
      %v970 = vand.u32 %v566, 4294901760
      %v971 = vsub.f32 %v566, %v970
      %v972 = vand.u32 %v971, 4294901760
      %v973 = vsub.f32 %v971, %v972
      %v974 = vand.u32 %v973, 4294901760
      %975 = vmatpush.msra.mxu0 %v974
      %v976 = vand.u32 %v565, 4294901760
      %v977 = vsub.f32 %v565, %v976
      %v978 = vand.u32 %v977, 4294901760
      %v979 = vsub.f32 %v977, %v978
      %v980 = vand.u32 %v979, 4294901760
      %981 = vmatpush.msra.mxu0 %v980
      %v982 = vand.u32 %v564, 4294901760
      %v983 = vsub.f32 %v564, %v982
      %v984 = vand.u32 %v983, 4294901760
      %v985 = vsub.f32 %v983, %v984
      %v986 = vand.u32 %v985, 4294901760
      %987 = vmatpush.msra.mxu0 %v986
      %v988 = vand.u32 %v563, 4294901760
      %v989 = vsub.f32 %v563, %v988
      %v990 = vand.u32 %v989, 4294901760
      %v991 = vsub.f32 %v989, %v990
      %v992 = vand.u32 %v991, 4294901760
      %993 = vmatpush.msra.mxu0 %v992
      %v994 = vand.u32 %v562, 4294901760
      %v995 = vsub.f32 %v562, %v994
      %v996 = vand.u32 %v995, 4294901760
      %v997 = vsub.f32 %v995, %v996
      %v998 = vand.u32 %v997, 4294901760
      %999 = vmatpush.msra.mxu0 %v998
      %v1000 = vand.u32 %v561, 4294901760
      %v1001 = vsub.f32 %v561, %v1000
      %v1002 = vand.u32 %v1001, 4294901760
      %v1003 = vsub.f32 %v1001, %v1002
      %v1004 = vand.u32 %v1003, 4294901760
      %1005 = vmatpush.msra.mxu0 %v1004
      %v1006 = vand.u32 %v560, 4294901760
      %v1007 = vsub.f32 %v560, %v1006
      %v1008 = vand.u32 %v1007, 4294901760
      %v1009 = vsub.f32 %v1007, %v1008
      %v1010 = vand.u32 %v1009, 4294901760
      %1011 = vmatpush.msra.mxu0 %v1010
      %v1012 = vand.u32 %v559, 4294901760
      %v1013 = vsub.f32 %v559, %v1012
      %v1014 = vand.u32 %v1013, 4294901760
      %v1015 = vsub.f32 %v1013, %v1014
      %v1016 = vand.u32 %v1015, 4294901760
      %1017 = vmatpush.msra.mxu0 %v1016
      %v1018 = vand.u32 %v558, 4294901760
      %v1019 = vsub.f32 %v558, %v1018
      %v1020 = vand.u32 %v1019, 4294901760
      %v1021 = vsub.f32 %v1019, %v1020
      %v1022 = vand.u32 %v1021, 4294901760
      %1023 = vmatpush.msra.mxu0 %v1022
      %v1024 = vand.u32 %v557, 4294901760
      %v1025 = vsub.f32 %v557, %v1024
      %v1026 = vand.u32 %v1025, 4294901760
      %v1027 = vsub.f32 %v1025, %v1026
      %v1028 = vand.u32 %v1027, 4294901760
      %1029 = vmatpush.msra.mxu0 %v1028
      %v1030 = vand.u32 %v556, 4294901760
      %v1031 = vsub.f32 %v556, %v1030
      %v1032 = vand.u32 %v1031, 4294901760
      %v1033 = vsub.f32 %v1031, %v1032
      %v1034 = vand.u32 %v1033, 4294901760
      %1035 = vmatpush.msra.mxu0 %v1034
      %v1036 = vand.u32 %v555, 4294901760
      %v1037 = vsub.f32 %v555, %v1036
      %v1038 = vand.u32 %v1037, 4294901760
      %v1039 = vsub.f32 %v1037, %v1038
      %v1040 = vand.u32 %v1039, 4294901760
      %1041 = vmatpush.msra.mxu0 %v1040
      %v1042 = vand.u32 %v554, 4294901760
      %v1043 = vsub.f32 %v554, %v1042
      %v1044 = vand.u32 %v1043, 4294901760
      %v1045 = vsub.f32 %v1043, %v1044
      %v1046 = vand.u32 %v1045, 4294901760
      %1047 = vmatpush.msra.mxu0 %v1046
      %v1048 = vand.u32 %v537, 4294901760
      %1049 = vmatmul.f32.gmra.mxu0 %v1048
      %v1050 = vpop.f32.mrf.mxu0
      %v1051 = vadd.f32 %v950, %v1050
      %1052 = vdwg.mxu0
      %v1053 = vand.u32 %v569, 4294901760
      %v1054 = vsub.f32 %v569, %v1053
      %1055 = vmatpush.msra.mxu0 %v1054
      %v1056 = vand.u32 %v568, 4294901760
      %v1057 = vsub.f32 %v568, %v1056
      %1058 = vmatpush.msra.mxu0 %v1057
      %v1059 = vand.u32 %v567, 4294901760
      %v1060 = vsub.f32 %v567, %v1059
      %1061 = vmatpush.msra.mxu0 %v1060
      %v1062 = vand.u32 %v566, 4294901760
      %v1063 = vsub.f32 %v566, %v1062
      %1064 = vmatpush.msra.mxu0 %v1063
      %v1065 = vand.u32 %v565, 4294901760
      %v1066 = vsub.f32 %v565, %v1065
      %1067 = vmatpush.msra.mxu0 %v1066
      %v1068 = vand.u32 %v564, 4294901760
      %v1069 = vsub.f32 %v564, %v1068
      %1070 = vmatpush.msra.mxu0 %v1069
      %v1071 = vand.u32 %v563, 4294901760
      %v1072 = vsub.f32 %v563, %v1071
      %1073 = vmatpush.msra.mxu0 %v1072
      %v1074 = vand.u32 %v562, 4294901760
      %v1075 = vsub.f32 %v562, %v1074
      %1076 = vmatpush.msra.mxu0 %v1075
      %v1077 = vand.u32 %v561, 4294901760
      %v1078 = vsub.f32 %v561, %v1077
      %1079 = vmatpush.msra.mxu0 %v1078
      %v1080 = vand.u32 %v560, 4294901760
      %v1081 = vsub.f32 %v560, %v1080
      %1082 = vmatpush.msra.mxu0 %v1081
      %v1083 = vand.u32 %v559, 4294901760
      %v1084 = vsub.f32 %v559, %v1083
      %1085 = vmatpush.msra.mxu0 %v1084
      %v1086 = vand.u32 %v558, 4294901760
      %v1087 = vsub.f32 %v558, %v1086
      %1088 = vmatpush.msra.mxu0 %v1087
      %v1089 = vand.u32 %v557, 4294901760
      %v1090 = vsub.f32 %v557, %v1089
      %1091 = vmatpush.msra.mxu0 %v1090
      %v1092 = vand.u32 %v556, 4294901760
      %v1093 = vsub.f32 %v556, %v1092
      %1094 = vmatpush.msra.mxu0 %v1093
      %v1095 = vand.u32 %v555, 4294901760
      %v1096 = vsub.f32 %v555, %v1095
      %1097 = vmatpush.msra.mxu0 %v1096
      %v1098 = vand.u32 %v554, 4294901760
      %v1099 = vsub.f32 %v554, %v1098
      %1100 = vmatpush.msra.mxu0 %v1099
      %v1101 = vand.u32 %v537, 4294901760
      %v1102 = vsub.f32 %v537, %v1101
      %1103 = vmatmul.f32.gmra.mxu0 %v1102
      %v1104 = vpop.f32.mrf.mxu0
      %v1105 = vadd.f32 %v1051, %v1104
      %1106 = vdwg.mxu0
      %v1107 = vand.u32 %v569, 4294901760
      %1108 = vmatpush.msra.mxu0 %v1107
      %v1109 = vand.u32 %v568, 4294901760
      %1110 = vmatpush.msra.mxu0 %v1109
      %v1111 = vand.u32 %v567, 4294901760
      %1112 = vmatpush.msra.mxu0 %v1111
      %v1113 = vand.u32 %v566, 4294901760
      %1114 = vmatpush.msra.mxu0 %v1113
      %v1115 = vand.u32 %v565, 4294901760
      %1116 = vmatpush.msra.mxu0 %v1115
      %v1117 = vand.u32 %v564, 4294901760
      %1118 = vmatpush.msra.mxu0 %v1117
      %v1119 = vand.u32 %v563, 4294901760
      %1120 = vmatpush.msra.mxu0 %v1119
      %v1121 = vand.u32 %v562, 4294901760
      %1122 = vmatpush.msra.mxu0 %v1121
      %v1123 = vand.u32 %v561, 4294901760
      %1124 = vmatpush.msra.mxu0 %v1123
      %v1125 = vand.u32 %v560, 4294901760
      %1126 = vmatpush.msra.mxu0 %v1125
      %v1127 = vand.u32 %v559, 4294901760
      %1128 = vmatpush.msra.mxu0 %v1127
      %v1129 = vand.u32 %v558, 4294901760
      %1130 = vmatpush.msra.mxu0 %v1129
      %v1131 = vand.u32 %v557, 4294901760
      %1132 = vmatpush.msra.mxu0 %v1131
      %v1133 = vand.u32 %v556, 4294901760
      %1134 = vmatpush.msra.mxu0 %v1133
      %v1135 = vand.u32 %v555, 4294901760
      %1136 = vmatpush.msra.mxu0 %v1135
      %v1137 = vand.u32 %v554, 4294901760
      %1138 = vmatpush.msra.mxu0 %v1137
      %v1139 = vand.u32 %v537, 4294901760
      %v1140 = vsub.f32 %v537, %v1139
      %v1141 = vand.u32 %v1140, 4294901760
      %1142 = vmatmul.f32.gmra.mxu0 %v1141
      %v1143 = vpop.f32.mrf.mxu0
      %v1144 = vadd.f32 %v1105, %v1143
      %1145 = vdwg.mxu0
      %v1146 = vand.u32 %v569, 4294901760
      %v1147 = vsub.f32 %v569, %v1146
      %v1148 = vand.u32 %v1147, 4294901760
      %1149 = vmatpush.msra.mxu0 %v1148
      %v1150 = vand.u32 %v568, 4294901760
      %v1151 = vsub.f32 %v568, %v1150
      %v1152 = vand.u32 %v1151, 4294901760
      %1153 = vmatpush.msra.mxu0 %v1152
      %v1154 = vand.u32 %v567, 4294901760
      %v1155 = vsub.f32 %v567, %v1154
      %v1156 = vand.u32 %v1155, 4294901760
      %1157 = vmatpush.msra.mxu0 %v1156
      %v1158 = vand.u32 %v566, 4294901760
      %v1159 = vsub.f32 %v566, %v1158
      %v1160 = vand.u32 %v1159, 4294901760
      %1161 = vmatpush.msra.mxu0 %v1160
      %v1162 = vand.u32 %v565, 4294901760
      %v1163 = vsub.f32 %v565, %v1162
      %v1164 = vand.u32 %v1163, 4294901760
      %1165 = vmatpush.msra.mxu0 %v1164
      %v1166 = vand.u32 %v564, 4294901760
      %v1167 = vsub.f32 %v564, %v1166
      %v1168 = vand.u32 %v1167, 4294901760
      %1169 = vmatpush.msra.mxu0 %v1168
      %v1170 = vand.u32 %v563, 4294901760
      %v1171 = vsub.f32 %v563, %v1170
      %v1172 = vand.u32 %v1171, 4294901760
      %1173 = vmatpush.msra.mxu0 %v1172
      %v1174 = vand.u32 %v562, 4294901760
      %v1175 = vsub.f32 %v562, %v1174
      %v1176 = vand.u32 %v1175, 4294901760
      %1177 = vmatpush.msra.mxu0 %v1176
      %v1178 = vand.u32 %v561, 4294901760
      %v1179 = vsub.f32 %v561, %v1178
      %v1180 = vand.u32 %v1179, 4294901760
      %1181 = vmatpush.msra.mxu0 %v1180
      %v1182 = vand.u32 %v560, 4294901760
      %v1183 = vsub.f32 %v560, %v1182
      %v1184 = vand.u32 %v1183, 4294901760
      %1185 = vmatpush.msra.mxu0 %v1184
      %v1186 = vand.u32 %v559, 4294901760
      %v1187 = vsub.f32 %v559, %v1186
      %v1188 = vand.u32 %v1187, 4294901760
      %1189 = vmatpush.msra.mxu0 %v1188
      %v1190 = vand.u32 %v558, 4294901760
      %v1191 = vsub.f32 %v558, %v1190
      %v1192 = vand.u32 %v1191, 4294901760
      %1193 = vmatpush.msra.mxu0 %v1192
      %v1194 = vand.u32 %v557, 4294901760
      %v1195 = vsub.f32 %v557, %v1194
      %v1196 = vand.u32 %v1195, 4294901760
      %1197 = vmatpush.msra.mxu0 %v1196
      %v1198 = vand.u32 %v556, 4294901760
      %v1199 = vsub.f32 %v556, %v1198
      %v1200 = vand.u32 %v1199, 4294901760
      %1201 = vmatpush.msra.mxu0 %v1200
      %v1202 = vand.u32 %v555, 4294901760
      %v1203 = vsub.f32 %v555, %v1202
      %v1204 = vand.u32 %v1203, 4294901760
      %1205 = vmatpush.msra.mxu0 %v1204
      %v1206 = vand.u32 %v554, 4294901760
      %v1207 = vsub.f32 %v554, %v1206
      %v1208 = vand.u32 %v1207, 4294901760
      %1209 = vmatpush.msra.mxu0 %v1208
      %v1210 = vand.u32 %v537, 4294901760
      %1211 = vmatmul.f32.gmra.mxu0 %v1210
      %v1212 = vpop.f32.mrf.mxu0
      %v1213 = vadd.f32 %v1144, %v1212
      %1214 = vdwg.mxu0
      %v1215 = vand.u32 %v569, 4294901760
      %1216 = vmatpush.msra.mxu0 %v1215
      %v1217 = vand.u32 %v568, 4294901760
      %1218 = vmatpush.msra.mxu0 %v1217
      %v1219 = vand.u32 %v567, 4294901760
      %1220 = vmatpush.msra.mxu0 %v1219
      %v1221 = vand.u32 %v566, 4294901760
      %1222 = vmatpush.msra.mxu0 %v1221
      %v1223 = vand.u32 %v565, 4294901760
      %1224 = vmatpush.msra.mxu0 %v1223
      %v1225 = vand.u32 %v564, 4294901760
      %1226 = vmatpush.msra.mxu0 %v1225
      %v1227 = vand.u32 %v563, 4294901760
      %1228 = vmatpush.msra.mxu0 %v1227
      %v1229 = vand.u32 %v562, 4294901760
      %1230 = vmatpush.msra.mxu0 %v1229
      %v1231 = vand.u32 %v561, 4294901760
      %1232 = vmatpush.msra.mxu0 %v1231
      %v1233 = vand.u32 %v560, 4294901760
      %1234 = vmatpush.msra.mxu0 %v1233
      %v1235 = vand.u32 %v559, 4294901760
      %1236 = vmatpush.msra.mxu0 %v1235
      %v1237 = vand.u32 %v558, 4294901760
      %1238 = vmatpush.msra.mxu0 %v1237
      %v1239 = vand.u32 %v557, 4294901760
      %1240 = vmatpush.msra.mxu0 %v1239
      %v1241 = vand.u32 %v556, 4294901760
      %1242 = vmatpush.msra.mxu0 %v1241
      %v1243 = vand.u32 %v555, 4294901760
      %1244 = vmatpush.msra.mxu0 %v1243
      %v1245 = vand.u32 %v554, 4294901760
      %1246 = vmatpush.msra.mxu0 %v1245
      %v1247 = vand.u32 %v537, 4294901760
      %1248 = vmatmul.f32.gmra.mxu0 %v1247
      %v1249 = vpop.f32.mrf.mxu0
      %v1250 = vadd.f32 %v1213, %v1249
      %1251 = vdwg.mxu0
      %vm1252 = vcmask 57344
      %1253 = vst.msk [vmem:[#allocation3] sm:$0x1] %vm1252, %v1250
    $region29: #{tpu_custom_call.1} parent=1 // pred_fallthru
      _
    // Predicated region
    $region30: #{tpu_custom_call.1} parent=1 // pred_check
      _
    $region31: #{tpu_custom_call.1} parent=1 // pred_check_branch
      %1255 = sbr.rel (0) target = $region33
    $region32: #{tpu_custom_call.1} parent=1 // pred_region
      %1257 = vsyncadd [#allocation4], 0
      %s1259 = sshll.u32 [#allocation3], 4
      %s1260 = int_to_ptr.vmem [resolvable:$true] %s1259
      %s1261 = sshll.u32 %s5, 4
      %s1262 = int_to_ptr.hbm [resolvable:$true] %s1261
      %1264 = dma.vmem_to_hbm [thread:$0]  %s1260, 16, %s1262, [#allocation4]
    $region33: #{tpu_custom_call.1} parent=1 // pred_fallthru
      _
    // Predicated region
    $region34: #{tpu_custom_call.1} parent=1 // pred_check
      _
    $region35: #{tpu_custom_call.1} parent=1 // pred_check_branch
      %1266 = sbr.rel (0) target = $region37
    $region36: #{tpu_custom_call.1} parent=1 // pred_region
      %1268 = dma.done [#allocation4], 16
    $region37: #{tpu_custom_call.1} parent=1 // pred_fallthru
      _
    %1269 = vsyncpa [#allocation4], 1

</llo_original>
